<compile_context>
chip_gen: v7x
topology: tpu7x:2x2x1
jax: 0.10.0
libtpu: 0.0.40
codegen_flags: <defaults>
</compile_context>

<pallas_src>
import jax
import jax.numpy as jnp
from jax.experimental import pallas as pl
from jax.experimental.pallas import tpu as pltpu


# ---------------------------------------------------------------------------
# Kernels
# ---------------------------------------------------------------------------
def _conv1x1_kernel(x_ref, w_ref, b_ref, o_ref):
    """Single-shot MXU kernel (no K tiling).

    x_ref: (1, Cin, tile_p)   lane-dense spatial tile (native dtype)
    w_ref: (tile_co, Cin)
    b_ref: (tile_co, 1)       f32
    o_ref: (1, tile_co, tile_p)
    """
    acc = jnp.dot(w_ref[...], x_ref[0], preferred_element_type=jnp.float32)
    o_ref[0] = (acc + b_ref[...]).astype(o_ref.dtype)


def _conv1x1_kernel_ktiled(x_ref, w_ref, b_ref, o_ref, acc_ref):
    """K-tiled MXU kernel: f32 VMEM accumulator, bias folded on the last k step.

    x_ref: (1, tile_k, tile_p)
    w_ref: (tile_co, tile_k)
    b_ref: (tile_co, 1)  f32
    o_ref: (1, tile_co, tile_p)
    acc_ref: (tile_co, tile_p) f32 scratch
    """
    k = pl.program_id(3)

    @pl.when(k == 0)
    def _():
        acc_ref[...] = jnp.zeros_like(acc_ref)

    acc_ref[...] += jnp.dot(w_ref[...], x_ref[0],
                            preferred_element_type=jnp.float32)

    @pl.when(k == pl.num_programs(3) - 1)
    def _():
        o_ref[0] = (acc_ref[...] + b_ref[...]).astype(o_ref.dtype)


# ---------------------------------------------------------------------------
# Tiling helpers
# ---------------------------------------------------------------------------
def _vmem_capacity_bytes():
    """Physical VMEM per TensorCore (generation-aware), safe fallback 64 MiB."""
    try:
        info = pltpu.get_tpu_info()
        cap = getattr(info, "vmem_capacity_bytes", None)
        if cap:
            return int(cap)
    except Exception:
        pass
    return 64 * 1024 * 1024  # conservative (v7x-sized) fallback


def _round_down_128(x):
    return (x // 128) * 128


def _round_up_128(x):
    return ((x + 127) // 128) * 128


def _pick_tiles(N, P, Cin, Cout, in_itemsize, out_itemsize, block_budget_bytes):
    """Choose (tile_co, tile_k, tile_p) against a VMEM block budget."""
    # Cout (M) tile: keep the whole head when it fits one MXU-sized block.
    tile_co = Cout if Cout <= 256 else 256

    # Cin (K) tile: only tile the contraction dim with exact divisors so the
    # reduction never accumulates padded garbage.
    tile_k = Cin
    if Cin > 512:
        for cand in (512, 384, 256, 128):
            if Cin % cand == 0:
                tile_k = cand
                break

    # Spatial (lane) tile from the VMEM budget: account for double-buffered
    # x / out blocks, double-buffered weight + bias blocks and the f32 scratch.
    fixed = 2 * tile_co * tile_k * in_itemsize + 2 * tile_co * 4
    per_col = (2 * tile_k * in_itemsize        # x block (double buffered)
               + 2 * tile_co * out_itemsize    # out block (double buffered)
               + tile_co * 4)                  # f32 accumulator
    avail = max(block_budget_bytes - fixed, 128 * per_col)
    tile_p = _round_down_128(avail // per_col)
    tile_p = max(128, min(65536, tile_p))
    if P <= tile_p:
        tile_p = P  # full extent is always a legal block

    # v7x has two TensorCores: make sure tiny problems still produce >= 2
    # parallel grid steps so both cores get work.
    num_co = pl.cdiv(Cout, tile_co)
    num_p = pl.cdiv(P, tile_p)
    if N * num_co * num_p == 1 and P >= 256:
        tile_p = max(128, _round_up_128(pl.cdiv(P, 2)))

    return tile_co, tile_k, tile_p


# ---------------------------------------------------------------------------
# Forward
# ---------------------------------------------------------------------------
def out_single_forward(x, weight, bias):
    """Forward of out_single: nn.Conv2d(in_channels, out_channels, kernel_size=1).

    x:      (N, C_in, H, W)
    weight: (C_out, C_in, 1, 1)
    bias:   (C_out,)
    returns (N, C_out, H, W)
    """
    N, Cin, H, W = x.shape
    Cout = weight.shape[0]
    P = H * W

    # Free (contiguous) reshapes only — no HBM transpose passes.
    xm = x.reshape(N, Cin, P)
    wm = weight.reshape(Cout, Cin)
    bm = bias.astype(jnp.float32).reshape(Cout, 1)

    vmem_cap = _vmem_capacity_bytes()
    vmem_limit = int(vmem_cap * 0.8)          # ~20% headroom for Mosaic scratch
    block_budget = int(vmem_limit * 0.7)      # blocks vs. compiler internals

    tile_co, tile_k, tile_p = _pick_tiles(
        N, P, Cin, Cout, x.dtype.itemsize, x.dtype.itemsize, block_budget)

    num_co = pl.cdiv(Cout, tile_co)
    num_p = pl.cdiv(P, tile_p)
    num_k = pl.cdiv(Cin, tile_k)

    out_shape = jax.ShapeDtypeStruct((N, Cout, P), x.dtype)

    if num_k == 1:
        # Cout-tile axis innermost: x block index is invariant across it, so
        # Pallas skips re-DMA of x when only the output-channel tile changes.
        grid_spec = pltpu.PrefetchScalarGridSpec(
            num_scalar_prefetch=0,
            grid=(N, num_p, num_co),
            in_specs=[
                pl.BlockSpec((1, Cin, tile_p), lambda n, p, c: (n, 0, p)),
                pl.BlockSpec((tile_co, Cin), lambda n, p, c: (c, 0)),
                pl.BlockSpec((tile_co, 1), lambda n, p, c: (c, 0)),
            ],
            out_specs=pl.BlockSpec((1, tile_co, tile_p),
                                   lambda n, p, c: (n, c, p)),
        )
        kernel = _conv1x1_kernel
        semantics = ("parallel", "parallel", "parallel")
    else:
        # K-tiled: innermost reduction axis with a persistent f32 accumulator.
        grid_spec = pltpu.PrefetchScalarGridSpec(
            num_scalar_prefetch=0,
            grid=(N, num_p, num_co, num_k),
            in_specs=[
                pl.BlockSpec((1, tile_k, tile_p), lambda n, p, c, k: (n, k, p)),
                pl.BlockSpec((tile_co, tile_k), lambda n, p, c, k: (c, k)),
                pl.BlockSpec((tile_co, 1), lambda n, p, c, k: (c, 0)),
            ],
            out_specs=pl.BlockSpec((1, tile_co, tile_p),
                                   lambda n, p, c, k: (n, c, p)),
            scratch_shapes=[pltpu.VMEM((tile_co, tile_p), jnp.float32)],
        )
        kernel = _conv1x1_kernel_ktiled
        semantics = ("parallel", "parallel", "arbitrary", "arbitrary")

    out = pl.pallas_call(
        kernel,
        out_shape=out_shape,
        grid_spec=grid_spec,
        compiler_params=pltpu.CompilerParams(
            dimension_semantics=semantics,
            vmem_limit_bytes=vmem_limit,
        ),
    )(xm, wm, bm)

    return out.reshape(N, Cout, H, W)


if __name__ == "__main__":
    key = jax.random.PRNGKey(0)
    k_x, k_w, k_b = jax.random.split(key, 3)

    N, Cin, Cout, H, W = 2, 4, 3, 16, 16

    x = jax.random.normal(k_x, (N, Cin, H, W), dtype=jnp.float32)
    # Deterministic parameter init (shapes from nn.Conv2d(Cin, Cout, 1)).
    weight = jax.random.normal(k_w, (Cout, Cin, 1, 1), dtype=jnp.float32) * 0.1
    bias = jax.random.normal(k_b, (Cout,), dtype=jnp.float32) * 0.1

    y = out_single_forward(x, weight, bias)
    y = jax.block_until_ready(y)

    # Pure-JAX reference check of the 1x1 conv.
    ref = jnp.einsum("nchw,oc->nohw", x, weight.reshape(Cout, Cin)) \
        + bias.reshape(1, Cout, 1, 1)
    assert y.shape == (N, Cout, H, W)
    assert jnp.allclose(y, ref, atol=1e-5, rtol=1e-5)

    print("KERNEL_OK")
</pallas_src>

<mosaic_0001>
module attributes {stable_mosaic.version = 11 : i64} {
  func.func @_conv1x1_kernel(%arg0: i32, %arg1: i32, %arg2: i32, %arg3: memref<1x4x256xf32, #tpu.memory_space<vmem>>, %arg4: memref<3x4xf32, #tpu.memory_space<vmem>>, %arg5: memref<3x1xf32, #tpu.memory_space<vmem>>, %arg6: memref<1x3x256xf32, #tpu.memory_space<vmem>>) attributes {dimension_semantics = [#tpu.dimension_semantics<parallel>, #tpu.dimension_semantics<parallel>, #tpu.dimension_semantics<parallel>], iteration_bounds = array<i64: 2, 1, 1>, scalar_prefetch = 0 : i64, scratch_operands = 0 : i64, tpu.core_type = #tpu.core_type<tc>, window_params = [{transform_indices = @transform_0, window_bounds = array<i64: 1, 4, 256>}, {transform_indices = @transform_1, window_bounds = array<i64: 3, 4>}, {transform_indices = @transform_2, window_bounds = array<i64: 3, 1>}, {transform_indices = @transform_3, window_bounds = array<i64: 1, 3, 256>}]} {
    %c0 = arith.constant 0 : index
    %c0_0 = arith.constant 0 : index
    %0 = vector.load %arg4[%c0, %c0_0] : memref<3x4xf32, #tpu.memory_space<vmem>>, vector<3x4xf32>
    %c0_1 = arith.constant 0 : index
    %c0_2 = arith.constant 0 : index
    %c0_3 = arith.constant 0 : index
    %1 = vector.load %arg3[%c0_1, %c0_2, %c0_3] : memref<1x4x256xf32, #tpu.memory_space<vmem>>, vector<1x4x256xf32>
    %2 = vector.shape_cast %1 : vector<1x4x256xf32> to vector<4x256xf32>
    %cst = arith.constant dense<0.000000e+00> : vector<3x256xf32>
    %3 = tpu.matmul %0, %2, %cst {dimension_numbers = #tpu.dot_dimension_numbers<[1], [0], [0], [1], [0, 0, 1, 1], [], []>} : vector<3x4xf32>, vector<4x256xf32>, vector<3x256xf32> -> vector<3x256xf32>
    %c0_4 = arith.constant 0 : index
    %c0_5 = arith.constant 0 : index
    %4 = vector.load %arg5[%c0_4, %c0_5] : memref<3x1xf32, #tpu.memory_space<vmem>>, vector<3x1xf32>
    %5 = vector.broadcast %4 : vector<3x1xf32> to vector<3x256xf32>
    %6 = arith.addf %3, %5 : vector<3x256xf32>
    %c0_6 = arith.constant 0 : index
    %c0_7 = arith.constant 0 : index
    %c0_8 = arith.constant 0 : index
    %7 = vector.load %arg6[%c0_6, %c0_7, %c0_8] : memref<1x3x256xf32, #tpu.memory_space<vmem>>, vector<1x3x256xf32>
    %8 = vector.shape_cast %7 : vector<1x3x256xf32> to vector<3x256xf32>
    %9 = vector.shape_cast %6 : vector<3x256xf32> to vector<1x3x256xf32>
    tpu.vector_store %arg6[%c0_6, %c0_7, %c0_8], %9 {strides = array<i32>} : memref<1x3x256xf32, #tpu.memory_space<vmem>>, vector<1x3x256xf32>,
    return
  }
  func.func @transform_0(%arg0: i32, %arg1: i32, %arg2: i32) -> (i32, i32, i32) {
    %c0_i32 = arith.constant 0 : i32
    %c0_i32_0 = arith.constant 0 : i32
    return %arg0, %c0_i32, %arg1 : i32, i32, i32
  }
  func.func @transform_1(%arg0: i32, %arg1: i32, %arg2: i32) -> (i32, i32) {
    %c0_i32 = arith.constant 0 : i32
    %c0_i32_0 = arith.constant 0 : i32
    return %arg2, %c0_i32 : i32, i32
  }
  func.func @transform_2(%arg0: i32, %arg1: i32, %arg2: i32) -> (i32, i32) {
    %c0_i32 = arith.constant 0 : i32
    %c0_i32_0 = arith.constant 0 : i32
    return %arg2, %c0_i32 : i32, i32
  }
  func.func @transform_3(%arg0: i32, %arg1: i32, %arg2: i32) -> (i32, i32, i32) {
    %c0_i32 = arith.constant 0 : i32
    return %arg0, %arg2, %arg1 : i32, i32, i32
  }
}

</mosaic_0001>

<llo_original>
// kernel: tpu_custom_call.1
$region0: #{tpu_custom_call.1}
  #allocation0 [shape = 'u32[]', space=smem, size = 0x4, offset = 0x4, fixed_abs, tag = 'smem constant byte address 0x4 - core index']
  #allocation1 [shape = 'u32[144,128]{1,0:T(1,128)}', space=vmem, size = 0x12000, scoped, tag = 'internal scratch']
  %s0 = inlined_call_operand.hbm [shape: f32[2,4,256], index: 0, kind: input, shape index: {}]
  %s1 = inlined_call_operand.vmem [shape: f32[3,4], index: 1, kind: input, shape index: {}]
  %s2 = inlined_call_operand.vmem [shape: f32[3,1], index: 2, kind: input, shape index: {}]
  %s3 = inlined_call_operand.vmem [shape: f32[2,3,256], index: 3, kind: output, shape index: {}]
  %s4 = sld [smem:[#allocation0]]
  $region49: #{tpu_custom_call.1} parent=0
    _
  %s6 = ssub.s32 1, %s4
  %s7 = scalar_select 0, %s6, %s4
  $region1: #{tpu_custom_call.1} parent=0
    #allocation2 [shape = 'u8[8192]{0}', space=vmem, size = 0x2000, scoped, tag = 'input window, operand 0']
    #allocation3 [shape = 's32[2]{0}', space=sflag, size = 0x8, scoped, tag = 'scoped memory for tpu_custom_call.1']
    %8 = vsyncpa [#allocation3], 0
    %s9 = scalar_lea.sflag [#allocation3], 1
    %10 = vsyncpa %s9, 0
    loop: start=0, step=1, limit=4
    $region2: #{tpu_custom_call.1} parent=1 // loop_pre_header
      _
    $region3: #{tpu_custom_call.1} parent=1 // loop_header
      %s12 = sphi 0, %s16
      %p13 = scmp.ge.s32.totalorder %s12, 4
      %s19 = sphi 0, %s38
      %s20 = sphi 0, %s34
      %s21 = sphi 0, %s30
      %s22 = sphi 0, %s19
      %s23 = sphi 0, %s20
      %s24 = sphi 0, %s21
      %s25 = sphi 0, %s22
      %s26 = sphi 0, %s23
      %s27 = sphi 0, %s24
      %s43 = sphi 0, %s45
      %s46 = sphi 0, %s43
      %s47 = sphi 0, %s46
      %s63 = sphi 0, %s47
      %s69 = sphi 0, %s71
      %s72 = sphi 0, %s69
      %s73 = sphi 0, %s72
      %s89 = sphi 0, %s73
      %s95 = sphi 0, %s97
      %s98 = sphi 0, %s95
      %s99 = sphi 0, %s98
      %s115 = sphi 0, %s99
      %s125 = sphi 0, %s127
      %s128 = sphi 0, %s125
      %s129 = sphi 0, %s128
      %s145 = sphi 0, %s129
    $region4: #{tpu_custom_call.1} parent=1 // loop_header_branch
      %15 = sbr.rel (%p13) target = $region8
    $region5: #{tpu_custom_call.1} parent=1 // loop_body
      %s17 = ssub.s32 %s12, 1
      %s18 = ssub.s32 %s12, 2
      %s28 = sadd.s32 1, %s21
      %p29 = scmp.ge.s32.totalorder %s28, 1
      %s30 = scalar_select %p29, 0, %s28
      %s31 = sadd.s32 1, %s20
      %s32 = scalar_select %p29, %s31, %s20
      %p33 = scmp.ge.s32.totalorder %s32, 1
      %s34 = scalar_select %p33, 0, %s32
      %s35 = sadd.s32 1, %s19
      %s36 = scalar_select %p33, %s35, %s19
      %p37 = scmp.ge.s32.totalorder %s36, 2
      %s38 = scalar_select %p37, 0, %s36
      %s39 = ssub.s32 %s19, %s38
      %s40 = ssub.s32 %s20, %s34
      %s41 = sor.u32 %s39, %s40
      %p42 = scmp.eq.s32.totalorder %s41, 0
      %s44 = sadd.s32 %s43, 1
      %s45 = scalar_select %p42, %s43, %s44
      %p48 = pneg %p42
      %p49 = scmp.eq.s32.totalorder %s12, 1
      %p50 = por %p48, %p49
      %p51 = scmp.ne.s32.totalorder %s43, %s46
      %p52 = scmp.eq.s32.totalorder %s12, 0
      %p53 = por %p51, %p52
      %p54 = scmp.ne.s32.totalorder %s43, %s46
      %p55 = scmp.eq.s32.totalorder %s17, 1
      %p56 = por %p54, %p55
      %p57 = scmp.ne.s32.totalorder %s46, %s47
      %p58 = scmp.eq.s32.totalorder %s17, 0
      %p59 = por %p57, %p58
      %p60 = scmp.ne.s32.totalorder %s46, %s47
      %p61 = scmp.eq.s32.totalorder %s18, 1
      %p62 = por %p60, %p61
      %p64 = scmp.ne.s32.totalorder %s47, %s63
      %p65 = scmp.eq.s32.totalorder %s18, 0
      %p66 = por %p64, %p65
      %s67 = ssub.s32 %s21, %s30
      %p68 = scmp.eq.s32.totalorder %s67, 0
      %s70 = sadd.s32 %s69, 1
      %s71 = scalar_select %p68, %s69, %s70
      %p74 = pneg %p68
      %p75 = scmp.eq.s32.totalorder %s12, 1
      %p76 = por %p74, %p75
      %p77 = scmp.ne.s32.totalorder %s69, %s72
      %p78 = scmp.eq.s32.totalorder %s12, 0
      %p79 = por %p77, %p78
      %p80 = scmp.ne.s32.totalorder %s69, %s72
      %p81 = scmp.eq.s32.totalorder %s17, 1
      %p82 = por %p80, %p81
      %p83 = scmp.ne.s32.totalorder %s72, %s73
      %p84 = scmp.eq.s32.totalorder %s17, 0
      %p85 = por %p83, %p84
      %p86 = scmp.ne.s32.totalorder %s72, %s73
      %p87 = scmp.eq.s32.totalorder %s18, 1
      %p88 = por %p86, %p87
      %p90 = scmp.ne.s32.totalorder %s73, %s89
      %p91 = scmp.eq.s32.totalorder %s18, 0
      %p92 = por %p90, %p91
      %s93 = ssub.s32 %s21, %s30
      %p94 = scmp.eq.s32.totalorder %s93, 0
      %s96 = sadd.s32 %s95, 1
      %s97 = scalar_select %p94, %s95, %s96
      %p100 = pneg %p94
      %p101 = scmp.eq.s32.totalorder %s12, 1
      %p102 = por %p100, %p101
      %p103 = scmp.ne.s32.totalorder %s95, %s98
      %p104 = scmp.eq.s32.totalorder %s12, 0
      %p105 = por %p103, %p104
      %p106 = scmp.ne.s32.totalorder %s95, %s98
      %p107 = scmp.eq.s32.totalorder %s17, 1
      %p108 = por %p106, %p107
      %p109 = scmp.ne.s32.totalorder %s98, %s99
      %p110 = scmp.eq.s32.totalorder %s17, 0
      %p111 = por %p109, %p110
      %p112 = scmp.ne.s32.totalorder %s98, %s99
      %p113 = scmp.eq.s32.totalorder %s18, 1
      %p114 = por %p112, %p113
      %p116 = scmp.ne.s32.totalorder %s99, %s115
      %p117 = scmp.eq.s32.totalorder %s18, 0
      %p118 = por %p116, %p117
      %s119 = ssub.s32 %s19, %s38
      %s120 = ssub.s32 %s21, %s30
      %s121 = sor.u32 %s119, %s120
      %s122 = ssub.s32 %s20, %s34
      %s123 = sor.u32 %s121, %s122
      %p124 = scmp.eq.s32.totalorder %s123, 0
      %s126 = sadd.s32 %s125, 1
      %s127 = scalar_select %p124, %s125, %s126
      %p130 = pneg %p124
      %p131 = scmp.eq.s32.totalorder %s12, 1
      %p132 = por %p130, %p131
      %p133 = scmp.ne.s32.totalorder %s125, %s128
      %p134 = scmp.eq.s32.totalorder %s12, 0
      %p135 = por %p133, %p134
      %p136 = scmp.ne.s32.totalorder %s125, %s128
      %p137 = scmp.eq.s32.totalorder %s17, 1
      %p138 = por %p136, %p137
      %p139 = scmp.ne.s32.totalorder %s128, %s129
      %p140 = scmp.eq.s32.totalorder %s17, 0
      %p141 = por %p139, %p140
      %p142 = scmp.ne.s32.totalorder %s128, %s129
      %p143 = scmp.eq.s32.totalorder %s18, 1
      %p144 = por %p142, %p143
      %p146 = scmp.ne.s32.totalorder %s129, %s145
      %p147 = scmp.eq.s32.totalorder %s18, 0
      %p148 = por %p146, %p147
      %p149 = scmp.le.s32.totalorder 1, %s12
      %p150 = scmp.lt.s32.totalorder %s12, 3
      %p151 = pnand %p149, %p150
      %p152 = pneg %p151
      // Predicated region
      $region9: #{tpu_custom_call.1} parent=5 // pred_check
        _
      $region10: #{tpu_custom_call.1} parent=5 // pred_check_branch
        %154 = sbr.rel (%p151) target = $region12
      $region11: #{tpu_custom_call.1} parent=5 // pred_region
        %s155 = ssub.s32 %s12, 1
        // Predicated region
        $region13: #{tpu_custom_call.1} parent=11 // pred_check
          %p156 = pneg %p85
        $region14: #{tpu_custom_call.1} parent=11 // pred_check_branch
          %158 = sbr.rel (%p156) target = $region16
        $region15: #{tpu_custom_call.1} parent=11 // pred_region
          %p159 = scmp.lt.s32.totalorder %s24, 0
          %s160 = scalar_select %p159, %s24, 0
          %s161 = smul.addr %s160, 4
          %s162 = scalar_lea.vmem %s1, %s161
        $region16: #{tpu_custom_call.1} parent=11 // pred_fallthru
          _
        // Predicated region
        $region17: #{tpu_custom_call.1} parent=11 // pred_check
          %p163 = pneg %p111
        $region18: #{tpu_custom_call.1} parent=11 // pred_check_branch
          %165 = sbr.rel (%p163) target = $region20
        $region19: #{tpu_custom_call.1} parent=11 // pred_region
          %p166 = scmp.lt.s32.totalorder %s24, 0
          %s167 = scalar_select %p166, %s24, 0
          %s168 = smul.addr %s167, 4
          %s169 = scalar_lea.vmem %s2, %s168
        $region20: #{tpu_custom_call.1} parent=11 // pred_fallthru
          _
      $region12: #{tpu_custom_call.1} parent=5 // pred_fallthru
        _
      %p170 = scmp.lt.s32.totalorder %s12, 2
      // Predicated region
      $region21: #{tpu_custom_call.1} parent=5 // pred_check
        %p171 = pneg %p170
      $region22: #{tpu_custom_call.1} parent=5 // pred_check_branch
        %173 = sbr.rel (%p171) target = $region24
      $region23: #{tpu_custom_call.1} parent=5 // pred_region
        // Predicated region
        $region25: #{tpu_custom_call.1} parent=23 // pred_check
          %p174 = pneg %p53
        $region26: #{tpu_custom_call.1} parent=23 // pred_check_branch
          %176 = sbr.rel (%p174) target = $region28
        $region27: #{tpu_custom_call.1} parent=23 // pred_region
          %s177 = sand.u32 %s43, 1
          %s178 = scalar_lea.sflag [#allocation3], %s177
          %s179 = sand.u32 %s43, 1
          %s180 = smul.addr %s179, 8
          %s181 = scalar_lea.vmem [#allocation2], %s180
          %s182 = smul.u32 2, %s20
          %s184 = ssub.s32 128, 128
          %185 = vsyncadd %s178, %s184
          %s186 = smul.addr %s19, 2
          %s187 = sadd.s32 %s182, %s186
          %s188 = smul.addr %s187, 64
          %s189 = scalar_lea.hbm %s0, %s188
          %s191 = sshll.u32 %s181, 4
          %s192 = int_to_ptr.vmem [resolvable:$true] %s191
          %194 = dma.hbm_to_vmem [thread:$0]  %s189, 128, %s192, %s178
        $region28: #{tpu_custom_call.1} parent=23 // pred_fallthru
          _
      $region24: #{tpu_custom_call.1} parent=5 // pred_fallthru
        _
      %p195 = scmp.le.s32.totalorder 1, %s12
      %p196 = scmp.lt.s32.totalorder %s12, 3
      %p197 = pnand %p195, %p196
      %p198 = pneg %p197
      // Predicated region
      $region29: #{tpu_custom_call.1} parent=5 // pred_check
        _
      $region30: #{tpu_custom_call.1} parent=5 // pred_check_branch
        %200 = sbr.rel (%p197) target = $region32
      $region31: #{tpu_custom_call.1} parent=5 // pred_region
        %s201 = ssub.s32 %s12, 1
        %s202 = sand.u32 %s46, 1
        %s203 = scalar_lea.sflag [#allocation3], %s202
        %s204 = sand.u32 %s46, 1
        %s205 = smul.addr %s204, 8
        %s206 = scalar_lea.vmem [#allocation2], %s205
        // Predicated region
        $region33: #{tpu_custom_call.1} parent=31 // pred_check
          %p207 = pneg %p59
        $region34: #{tpu_custom_call.1} parent=31 // pred_check_branch
          %209 = sbr.rel (%p207) target = $region36
        $region35: #{tpu_custom_call.1} parent=31 // pred_region
          %210 = dma.done %s203, 128
        $region36: #{tpu_custom_call.1} parent=31 // pred_fallthru
          _
        %s211 = sand.u32 %s46, 1
        %s212 = scalar_lea.sflag [#allocation3], %s211
        %s213 = sand.u32 %s46, 1
        %s214 = smul.addr %s213, 8
        %s215 = scalar_lea.vmem [#allocation2], %s214
        %p216 = pneg %p59
        %p217 = pneg %p56
        %p218 = scmp.lt.s32.totalorder %s24, 0
        %s219 = scalar_select %p218, %s24, 0
        %s220 = smul.addr %s219, 4
        %s221 = scalar_lea.vmem %s1, %s220
        %p222 = pneg %p85
        %p223 = pneg %p82
        %p224 = scmp.lt.s32.totalorder %s24, 0
        %s225 = scalar_select %p224, %s24, 0
        %s226 = smul.addr %s225, 4
        %s227 = scalar_lea.vmem %s2, %s226
        %p228 = pneg %p111
        %p229 = pneg %p108
        %p230 = pneg %p141
        %p231 = pneg %p138
        %s232 = smul.u32 2, %s23
        %p233 = scmp.lt.s32.totalorder %s22, 1
        %s234 = scalar_select %p233, %s22, 1
        %p235 = scmp.lt.s32.totalorder %s24, 0
        %s236 = scalar_select %p235, %s24, 0
        %p237 = scmp.lt.s32.totalorder %s232, 1
        %s238 = scalar_select %p237, %s232, 1
        %s239 = smul.addr %s236, 2
        %s240 = sadd.s32 %s238, %s239
        %s241 = smul.addr %s234, 2
        %s242 = sadd.s32 %s240, %s241
        %s243 = smul.addr %s242, 4
        %s244 = scalar_lea.vmem %s3, %s243
        %s245 = smul.u32 2, %s23
        %p246 = scmp.lt.s32.totalorder %s24, 0
        %s247 = scalar_select %p246, %s24, 0
        %s248 = smul.addr %s247, 4
        %s249 = scalar_lea.vmem %s1, %s248
        %p250 = scmp.lt.s32.totalorder %s24, 0
        %s251 = scalar_select %p250, %s24, 0
        %s252 = smul.addr %s251, 4
        %s253 = scalar_lea.vmem %s2, %s252
        %s254 = smul.u32 2, %s23
        %p255 = scmp.lt.s32.totalorder %s22, 1
        %s256 = scalar_select %p255, %s22, 1
        %p257 = scmp.lt.s32.totalorder %s24, 0
        %s258 = scalar_select %p257, %s24, 0
        %p259 = scmp.lt.s32.totalorder %s254, 1
        %s260 = scalar_select %p259, %s254, 1
        %s261 = smul.addr %s258, 2
        %s262 = sadd.s32 %s260, %s261
        %s263 = smul.addr %s256, 2
        %s264 = sadd.s32 %s262, %s263
        %s265 = smul.addr %s264, 4
        %s266 = scalar_lea.vmem %s3, %s265
        %s267 = smul.u32 2, %s23
        %v268 = vld [vmem:[%s249] sm:$0x7]
        %v269 = vld [vmem:[%s206] sm:$0xff]
        %v270 = vld [vmem:[%s253] sm:$0x7]
        %272 = vset.pattern.permute.xlu0 0
        %273 = vperm.xlu0 %272, %v270
        %v274 = vpop.permute.xlu0 %273
        %v277 = vcombine.high %v269, %v269
        %vm278 = vcmask 31744
        %v280 = vsel %vm278, %v268, 0
        %vm282 = vcmask 1043456
        %v283 = vsel %vm282, %v269, 0
        %v285 = vsel %vm282, %v277, 0
        %287 = vmatprep.subr.mxu0 %v285
        %288 = vmatpush1.msra.mxu0 %v283
        %289 = vmatprep.subr.mxu0 0.0
        %290 = vmatpush1.msra.mxu0 0.0
        %291 = vmatprep.subr.mxu0 0.0
        %292 = vmatpush1.msra.mxu0 0.0
        %293 = vmatprep.subr.mxu0 0.0
        %294 = vmatpush1.msra.mxu0 0.0
        %295 = vmatprep.subr.mxu0 0.0
        %296 = vmatpush1.msra.mxu0 0.0
        %297 = vmatprep.subr.mxu0 0.0
        %298 = vmatpush1.msra.mxu0 0.0
        %299 = vmatprep.subr.mxu0 0.0
        %300 = vmatpush1.msra.mxu0 0.0
        %301 = vmatprep.subr.mxu0 0.0
        %302 = vmatpush1.msra.mxu0 0.0
        %303 = vmatprep.subr.mxu0 0.0
        %304 = vmatpush1.msra.mxu0 0.0
        %305 = vmatprep.subr.mxu0 0.0
        %306 = vmatpush1.msra.mxu0 0.0
        %307 = vmatprep.subr.mxu0 0.0
        %308 = vmatpush1.msra.mxu0 0.0
        %309 = vmatprep.subr.mxu0 0.0
        %310 = vmatpush1.msra.mxu0 0.0
        %311 = vmatprep.subr.mxu0 0.0
        %312 = vmatpush1.msra.mxu0 0.0
        %313 = vmatprep.subr.mxu0 0.0
        %314 = vmatpush1.msra.mxu0 0.0
        %315 = vmatprep.subr.mxu0 0.0
        %316 = vmatpush1.msra.mxu0 0.0
        %317 = vmatprep.subr.mxu0 0.0
        %318 = vmatpush1.msra.mxu0 0.0
        %319 = vmatprep.subr.mxu0 0.0
        %320 = vmatpush1.msra.mxu0 0.0
        %321 = vmatprep.subr.mxu0 0.0
        %322 = vmatpush1.msra.mxu0 0.0
        %323 = vmatprep.subr.mxu0 0.0
        %324 = vmatpush1.msra.mxu0 0.0
        %325 = vmatprep.subr.mxu0 0.0
        %326 = vmatpush1.msra.mxu0 0.0
        %327 = vmatprep.subr.mxu0 0.0
        %328 = vmatpush1.msra.mxu0 0.0
        %329 = vmatprep.subr.mxu0 0.0
        %330 = vmatpush1.msra.mxu0 0.0
        %331 = vmatprep.subr.mxu0 0.0
        %332 = vmatpush1.msra.mxu0 0.0
        %333 = vmatprep.subr.mxu0 0.0
        %334 = vmatpush1.msra.mxu0 0.0
        %335 = vmatprep.subr.mxu0 0.0
        %336 = vmatpush1.msra.mxu0 0.0
        %337 = vmatprep.subr.mxu0 0.0
        %338 = vmatpush1.msra.mxu0 0.0
        %339 = vmatprep.subr.mxu0 0.0
        %340 = vmatpush1.msra.mxu0 0.0
        %341 = vmatprep.subr.mxu0 0.0
        %342 = vmatpush1.msra.mxu0 0.0
        %343 = vmatprep.subr.mxu0 0.0
        %344 = vmatpush1.msra.mxu0 0.0
        %345 = vmatprep.subr.mxu0 0.0
        %346 = vmatpush1.msra.mxu0 0.0
        %347 = vmatprep.subr.mxu0 0.0
        %348 = vmatpush1.msra.mxu0 0.0
        %349 = vmatprep.subr.mxu0 0.0
        %350 = vmatpush1.msra.mxu0 0.0
        %351 = vmatprep.mubr.f32.mxu0 0.0
        %352 = vmatmul.mubr.f32.gmra.mrb[0].mxu0 %v280
        %v353 = vpop.f32.mrb[0].mxu0
        %v354 = vadd.f32 %v274, %v353
        %v355 = vpop.f32.mrb[0].mxu0
        %v356 = vadd.f32 %v274, %v355
        %357 = vdwg.mxu0
        %v360 = vcombine.low %v354, %v356
        %362 = vst [vmem:[%s266] sm:$0x77] %v360
        %s363 = smul.u32 2, %s23
        %p364 = scmp.lt.s32.totalorder %s22, 1
        %s365 = scalar_select %p364, %s22, 1
        %p366 = scmp.lt.s32.totalorder %s24, 0
        %s367 = scalar_select %p366, %s24, 0
        %p368 = scmp.lt.s32.totalorder %s363, 1
        %s369 = scalar_select %p368, %s363, 1
        %s370 = smul.addr %s367, 2
        %s371 = sadd.s32 %s369, %s370
        %s372 = smul.addr %s365, 2
        %s373 = sadd.s32 %s371, %s372
        %s374 = smul.addr %s373, 4
        %s375 = scalar_lea.vmem %s3, %s374
        // Predicated region
        $region37: #{tpu_custom_call.1} parent=31 // pred_check
          %p376 = pneg %p138
        $region38: #{tpu_custom_call.1} parent=31 // pred_check_branch
          %378 = sbr.rel (%p376) target = $region40
        $region39: #{tpu_custom_call.1} parent=31 // pred_region
          %s379 = smul.u32 2, %s23
        $region40: #{tpu_custom_call.1} parent=31 // pred_fallthru
          _
      $region32: #{tpu_custom_call.1} parent=5 // pred_fallthru
        _
      %p380 = scmp.le.s32.totalorder 2, %s12
      // Predicated region
      $region41: #{tpu_custom_call.1} parent=5 // pred_check
        %p381 = pneg %p380
      $region42: #{tpu_custom_call.1} parent=5 // pred_check_branch
        %383 = sbr.rel (%p381) target = $region44
      $region43: #{tpu_custom_call.1} parent=5 // pred_region
        %s384 = ssub.s32 %s12, 2
        // Predicated region
        $region45: #{tpu_custom_call.1} parent=43 // pred_check
          %p385 = pneg %p144
        $region46: #{tpu_custom_call.1} parent=43 // pred_check_branch
          %387 = sbr.rel (%p385) target = $region48
        $region47: #{tpu_custom_call.1} parent=43 // pred_region
          %s388 = smul.u32 2, %s26
          %p389 = scmp.lt.s32.totalorder %s25, 1
          %s390 = scalar_select %p389, %s25, 1
          %p391 = scmp.lt.s32.totalorder %s27, 0
          %s392 = scalar_select %p391, %s27, 0
          %p393 = scmp.lt.s32.totalorder %s388, 1
          %s394 = scalar_select %p393, %s388, 1
          %s395 = smul.addr %s392, 2
          %s396 = sadd.s32 %s394, %s395
          %s397 = smul.addr %s390, 2
          %s398 = sadd.s32 %s396, %s397
          %s399 = smul.addr %s398, 4
          %s400 = scalar_lea.vmem %s3, %s399
        $region48: #{tpu_custom_call.1} parent=43 // pred_fallthru
          _
      $region44: #{tpu_custom_call.1} parent=5 // pred_fallthru
        _
    $region6: #{tpu_custom_call.1} parent=1 // loop_footer
      %s16 = sadd.s32 1, %s12
    $region7: #{tpu_custom_call.1} parent=1 // loop_footer_branch
      %11 = sbr.rel target = $region3
    $region8: #{tpu_custom_call.1} parent=1 // loop_exit
      _
    %401 = vsyncpa [#allocation3], 1
    %s402 = scalar_lea.sflag [#allocation3], 1
    %403 = vsyncpa %s402, 1

</llo_original>
